<compile_context>
chip_gen: v7x
topology: tpu7x:2x2x1
jax: 0.10.0
libtpu: 0.0.40
codegen_flags: <defaults>
</compile_context>

<pallas_src>
from functools import partial

import jax
import jax.numpy as jnp
from jax.experimental import pallas as pl
from jax.experimental.pallas import tpu as pltpu

LANE = 128


def _round_up(x, m):
    return (x + m - 1) // m * m


def _make_kernel(n_labels):
    def _linear_softmax_kernel(x_ref, w_ref, b_ref, o_ref):
        # x_ref: (tm, D), w_ref: (D, Lp), b_ref: (1, Lp), o_ref: (tm, n_labels)
        logits = jnp.dot(x_ref[...], w_ref[...],
                         preferred_element_type=jnp.float32) + b_ref[...]
        m = jnp.max(logits, axis=-1, keepdims=True)
        e = jnp.exp(logits - m)          # padded lanes: exp(-1e30 - m) == 0 exactly
        denom = jnp.sum(e, axis=-1, keepdims=True)
        probs = e / denom                # exact normalization (rows sum to 1)
        # Narrow store: only the real label lanes go to HBM.
        o_ref[...] = probs[:, :n_labels].astype(o_ref.dtype)
    return _linear_softmax_kernel


def prepare_params(weight, bias):
    """One-time param prep (keep out of the per-step hot path).

    weight: (L, D) torch nn.Linear layout; bias: (L,).
    Returns lane-dense padded (D, Lp) weight and (1, Lp) bias, Lp = round_up(L, 128).
    Padded weight columns are 0 and padded bias entries are -1e30 (f32), so padded
    logits contribute exactly 0 to the softmax denominator.
    """
    L, D = weight.shape
    Lp = _round_up(L, LANE)
    w_pad = jnp.zeros((D, Lp), weight.dtype).at[:, :L].set(weight.T)
    b_pad = jnp.full((1, Lp), -1e30, dtype=jnp.float32).at[0, :L].set(
        bias.astype(jnp.float32))
    return w_pad, b_pad


@partial(jax.jit, static_argnums=(3,))
def muti_cls_forward(x, w_pad, b_pad, n_labels):
    """x: (B, D); w_pad: (D, Lp); b_pad: (1, Lp). Returns (B, n_labels) f32 probs."""
    B, D = x.shape
    Lp = w_pad.shape[1]

    # Batch tile: multiple of 8, at most half the batch (so v7x's two TensorCores
    # both get work even for small B), capped at 2048 rows for large batches.
    # Footprint per step after output-narrowing is tiny, so double buffering is cheap.
    tm = min(2048, max(8, _round_up(pl.cdiv(B, 2), 8)))
    grid = (pl.cdiv(B, tm),)   # ragged last tile: OOB writes are masked by Pallas

    # NOTE: at tiny shapes (B ~ 64) this call is launch-overhead bound; callers with
    # small batches may prefer plain XLA softmax(x @ W.T + b).
    out = pl.pallas_call(
        _make_kernel(n_labels),
        out_shape=jax.ShapeDtypeStruct((B, n_labels), jnp.float32),
        grid=grid,
        in_specs=[
            pl.BlockSpec((tm, D), lambda i: (i, 0)),   # x tiles stream over batch
            pl.BlockSpec((D, Lp), lambda i: (0, 0)),   # weight stays resident
            pl.BlockSpec((1, Lp), lambda i: (0, 0)),   # bias stays resident
        ],
        out_specs=pl.BlockSpec((tm, n_labels), lambda i: (i, 0)),
        compiler_params=pltpu.CompilerParams(
            dimension_semantics=("parallel",),   # shard batch across TCs on v7x
        ),
    )(x, w_pad, b_pad)

    return out


if __name__ == "__main__":
    # Small shapes consistent with the module: batch=64, input_size=32, n_labels=10.
    B, D, L = 64, 32, 10

    key = jax.random.PRNGKey(0)
    kx, kw, kb = jax.random.split(key, 3)

    x = jax.random.normal(kx, (B, D), dtype=jnp.float32)
    # Deterministic "nn.Linear(input_size, n_labels)" parameters (torch layout).
    weight = jax.random.normal(kw, (L, D), dtype=jnp.float32) * (1.0 / jnp.sqrt(D))
    bias = jax.random.normal(kb, (L,), dtype=jnp.float32) * 0.01

    w_pad, b_pad = prepare_params(weight, bias)
    out = muti_cls_forward(x, w_pad, b_pad, L)
    out = jax.block_until_ready(out)

    # Reference check against plain JAX.
    ref = jax.nn.softmax(x @ weight.T + bias, axis=1)
    assert out.shape == (B, L)
    assert jnp.allclose(out, ref, atol=1e-5, rtol=1e-4)
    assert jnp.allclose(jnp.sum(out, axis=1), 1.0, atol=1e-5)

    print("KERNEL_OK")
</pallas_src>

<mosaic_0001>
module attributes {stable_mosaic.version = 11 : i64} {
  func.func @_linear_softmax_kernel(%arg0: i32, %arg1: memref<32x32xf32, #tpu.memory_space<vmem>>, %arg2: memref<32x128xf32, #tpu.memory_space<vmem>>, %arg3: memref<1x128xf32, #tpu.memory_space<vmem>>, %arg4: memref<32x10xf32, #tpu.memory_space<vmem>>) attributes {dimension_semantics = [#tpu.dimension_semantics<parallel>], iteration_bounds = array<i64: 2>, scalar_prefetch = 0 : i64, scratch_operands = 0 : i64, tpu.core_type = #tpu.core_type<tc>, window_params = [{transform_indices = @transform_0, window_bounds = array<i64: 32, 32>}, {pipeline_mode = #tpu.pipeline_mode<synchronous>, transform_indices = @transform_1, window_bounds = array<i64: 32, 128>}, {pipeline_mode = #tpu.pipeline_mode<synchronous>, transform_indices = @transform_2, window_bounds = array<i64: 1, 128>}, {transform_indices = @transform_3, window_bounds = array<i64: 32, 10>}]} {
    %c0 = arith.constant 0 : index
    %c0_0 = arith.constant 0 : index
    %0 = vector.load %arg1[%c0, %c0_0] : memref<32x32xf32, #tpu.memory_space<vmem>>, vector<32x32xf32>
    %c0_1 = arith.constant 0 : index
    %c0_2 = arith.constant 0 : index
    %1 = vector.load %arg2[%c0_1, %c0_2] : memref<32x128xf32, #tpu.memory_space<vmem>>, vector<32x128xf32>
    %cst = arith.constant dense<0.000000e+00> : vector<32x128xf32>
    %2 = tpu.matmul %0, %1, %cst {dimension_numbers = #tpu.dot_dimension_numbers<[1], [0], [0], [1], [0, 0, 1, 1], [], []>} : vector<32x32xf32>, vector<32x128xf32>, vector<32x128xf32> -> vector<32x128xf32>
    %c0_3 = arith.constant 0 : index
    %c0_4 = arith.constant 0 : index
    %3 = vector.load %arg3[%c0_3, %c0_4] : memref<1x128xf32, #tpu.memory_space<vmem>>, vector<1x128xf32>
    %4 = vector.broadcast %3 : vector<1x128xf32> to vector<32x128xf32>
    %5 = arith.addf %2, %4 : vector<32x128xf32>
    %cst_5 = arith.constant dense<0xFF800000> : vector<32xf32>
    %6 = vector.multi_reduction <maximumf>, %5, %cst_5 [1] : vector<32x128xf32> to vector<32xf32>
    %7 = vector.shape_cast %6 : vector<32xf32> to vector<32x1xf32>
    %8 = vector.broadcast %7 : vector<32x1xf32> to vector<32x128xf32>
    %9 = arith.subf %5, %8 : vector<32x128xf32>
    %10 = math.exp %9 : vector<32x128xf32>
    %cst_6 = arith.constant dense<0.000000e+00> : vector<32xf32>
    %11 = vector.multi_reduction <add>, %10, %cst_6 [1] : vector<32x128xf32> to vector<32xf32>
    %12 = vector.shape_cast %11 : vector<32xf32> to vector<32x1xf32>
    %13 = vector.broadcast %12 : vector<32x1xf32> to vector<32x128xf32>
    %14 = arith.divf %10, %13 : vector<32x128xf32>
    %15 = vector.extract_strided_slice %14 {offsets = [0, 0], sizes = [32, 10], strides = [1, 1]} : vector<32x128xf32> to vector<32x10xf32>
    %c0_7 = arith.constant 0 : index
    %c0_8 = arith.constant 0 : index
    %16 = vector.load %arg4[%c0_7, %c0_8] : memref<32x10xf32, #tpu.memory_space<vmem>>, vector<32x10xf32>
    tpu.vector_store %arg4[%c0_7, %c0_8], %15 {strides = array<i32>} : memref<32x10xf32, #tpu.memory_space<vmem>>, vector<32x10xf32>,
    return
  }
  func.func @transform_0(%arg0: i32) -> (i32, i32) {
    %c0_i32 = arith.constant 0 : i32
    %c0_i32_0 = arith.constant 0 : i32
    return %arg0, %c0_i32 : i32, i32
  }
  func.func @transform_1(%arg0: i32) -> (i32, i32) {
    %c0_i32 = arith.constant 0 : i32
    %c0_i32_0 = arith.constant 0 : i32
    %c0_i32_1 = arith.constant 0 : i32
    return %c0_i32, %c0_i32_0 : i32, i32
  }
  func.func @transform_2(%arg0: i32) -> (i32, i32) {
    %c0_i32 = arith.constant 0 : i32
    %c0_i32_0 = arith.constant 0 : i32
    %c0_i32_1 = arith.constant 0 : i32
    return %c0_i32, %c0_i32_0 : i32, i32
  }
  func.func @transform_3(%arg0: i32) -> (i32, i32) {
    %c0_i32 = arith.constant 0 : i32
    %c0_i32_0 = arith.constant 0 : i32
    return %arg0, %c0_i32 : i32, i32
  }
}

</mosaic_0001>

<llo_original>
// kernel: muti_cls_forward.1
$region0: #{muti_cls_forward.1}
  #allocation0 [shape = 'u32[]', space=smem, size = 0x4, offset = 0x4, fixed_abs, tag = 'smem constant byte address 0x4 - core index']
  #allocation1 [shape = 'u32[144,128]{1,0:T(1,128)}', space=vmem, size = 0x12000, scoped, tag = 'internal scratch']
  %s0 = inlined_call_operand.vmem [shape: f32[64,32], index: 0, kind: input, shape index: {}]
  %s1 = inlined_call_operand.vmem [shape: f32[32,128], index: 1, kind: input, shape index: {}]
  %s2 = inlined_call_operand.vmem [shape: f32[1,128], index: 2, kind: input, shape index: {}]
  %s3 = inlined_call_operand.vmem [shape: f32[64,10], index: 3, kind: output, shape index: {}]
  %s4 = sld [smem:[#allocation0]]
  $region45: #{muti_cls_forward.1} parent=0
    _
  %s6 = ssub.s32 1, %s4
  %s7 = scalar_select 0, %s6, %s4
  loop: start=0, step=1, limit=4
  $region2: #{muti_cls_forward.1} parent=0 // loop_pre_header
    _
  $region3: #{muti_cls_forward.1} parent=0 // loop_header
    %s9 = sphi 0, %s13
    %p10 = scmp.ge.s32.totalorder %s9, 4
    %s19 = sphi 0, %s21
    %s22 = sphi 0, %s19
    %s23 = sphi 0, %s22
    %s39 = sphi 0, %s23
    %s43 = sphi 0, %s43
    %s45 = sphi 0, %s43
    %s46 = sphi 0, %s45
    %s60 = sphi 0, %s46
    %s64 = sphi 0, %s64
    %s66 = sphi 0, %s64
    %s67 = sphi 0, %s66
    %s81 = sphi 0, %s67
    %s87 = sphi 0, %s89
    %s90 = sphi 0, %s87
    %s91 = sphi 0, %s90
    %s107 = sphi 0, %s91
  $region4: #{muti_cls_forward.1} parent=0 // loop_header_branch
    %12 = sbr.rel (%p10) target = $region8
  $region5: #{muti_cls_forward.1} parent=0 // loop_body
    %s14 = ssub.s32 %s9, 1
    %s15 = ssub.s32 %s9, 2
    %s16 = sadd.s32 %s9, 1
    %s17 = ssub.s32 %s9, %s16
    %p18 = scmp.eq.s32.totalorder %s17, 0
    %s20 = sadd.s32 %s19, 1
    %s21 = scalar_select %p18, %s19, %s20
    %p24 = pneg %p18
    %p25 = scmp.eq.s32.totalorder %s9, 1
    %p26 = por %p24, %p25
    %p27 = scmp.ne.s32.totalorder %s19, %s22
    %p28 = scmp.eq.s32.totalorder %s9, 0
    %p29 = por %p27, %p28
    %p30 = scmp.ne.s32.totalorder %s19, %s22
    %p31 = scmp.eq.s32.totalorder %s14, 1
    %p32 = por %p30, %p31
    %p33 = scmp.ne.s32.totalorder %s22, %s23
    %p34 = scmp.eq.s32.totalorder %s14, 0
    %p35 = por %p33, %p34
    %p36 = scmp.ne.s32.totalorder %s22, %s23
    %p37 = scmp.eq.s32.totalorder %s15, 1
    %p38 = por %p36, %p37
    %p40 = scmp.ne.s32.totalorder %s23, %s39
    %p41 = scmp.eq.s32.totalorder %s15, 0
    %p42 = por %p40, %p41
    %s44 = sadd.s32 %s43, 1
    %p47 = scmp.eq.s32.totalorder %s9, 1
    %p48 = scmp.ne.s32.totalorder %s43, %s45
    %p49 = scmp.eq.s32.totalorder %s9, 0
    %p50 = por %p48, %p49
    %p51 = scmp.ne.s32.totalorder %s43, %s45
    %p52 = scmp.eq.s32.totalorder %s14, 1
    %p53 = por %p51, %p52
    %p54 = scmp.ne.s32.totalorder %s45, %s46
    %p55 = scmp.eq.s32.totalorder %s14, 0
    %p56 = por %p54, %p55
    %p57 = scmp.ne.s32.totalorder %s45, %s46
    %p58 = scmp.eq.s32.totalorder %s15, 1
    %p59 = por %p57, %p58
    %p61 = scmp.ne.s32.totalorder %s46, %s60
    %p62 = scmp.eq.s32.totalorder %s15, 0
    %p63 = por %p61, %p62
    %s65 = sadd.s32 %s64, 1
    %p68 = scmp.eq.s32.totalorder %s9, 1
    %p69 = scmp.ne.s32.totalorder %s64, %s66
    %p70 = scmp.eq.s32.totalorder %s9, 0
    %p71 = por %p69, %p70
    %p72 = scmp.ne.s32.totalorder %s64, %s66
    %p73 = scmp.eq.s32.totalorder %s14, 1
    %p74 = por %p72, %p73
    %p75 = scmp.ne.s32.totalorder %s66, %s67
    %p76 = scmp.eq.s32.totalorder %s14, 0
    %p77 = por %p75, %p76
    %p78 = scmp.ne.s32.totalorder %s66, %s67
    %p79 = scmp.eq.s32.totalorder %s15, 1
    %p80 = por %p78, %p79
    %p82 = scmp.ne.s32.totalorder %s67, %s81
    %p83 = scmp.eq.s32.totalorder %s15, 0
    %p84 = por %p82, %p83
    %s85 = ssub.s32 %s9, %s16
    %p86 = scmp.eq.s32.totalorder %s85, 0
    %s88 = sadd.s32 %s87, 1
    %s89 = scalar_select %p86, %s87, %s88
    %p92 = pneg %p86
    %p93 = scmp.eq.s32.totalorder %s9, 1
    %p94 = por %p92, %p93
    %p95 = scmp.ne.s32.totalorder %s87, %s90
    %p96 = scmp.eq.s32.totalorder %s9, 0
    %p97 = por %p95, %p96
    %p98 = scmp.ne.s32.totalorder %s87, %s90
    %p99 = scmp.eq.s32.totalorder %s14, 1
    %p100 = por %p98, %p99
    %p101 = scmp.ne.s32.totalorder %s90, %s91
    %p102 = scmp.eq.s32.totalorder %s14, 0
    %p103 = por %p101, %p102
    %p104 = scmp.ne.s32.totalorder %s90, %s91
    %p105 = scmp.eq.s32.totalorder %s15, 1
    %p106 = por %p104, %p105
    %p108 = scmp.ne.s32.totalorder %s91, %s107
    %p109 = scmp.eq.s32.totalorder %s15, 0
    %p110 = por %p108, %p109
    %p111 = scmp.le.s32.totalorder 1, %s9
    %p112 = scmp.lt.s32.totalorder %s9, 3
    %p113 = pnand %p111, %p112
    %p114 = pneg %p113
    // Predicated region
    $region9: #{muti_cls_forward.1} parent=5 // pred_check
      _
    $region10: #{muti_cls_forward.1} parent=5 // pred_check_branch
      %116 = sbr.rel (%p113) target = $region12
    $region11: #{muti_cls_forward.1} parent=5 // pred_region
      %s117 = ssub.s32 %s9, 1
      // Predicated region
      $region13: #{muti_cls_forward.1} parent=11 // pred_check
        %p118 = pneg %p56
      $region14: #{muti_cls_forward.1} parent=11 // pred_check_branch
        %120 = sbr.rel (%p118) target = $region16
      $region15: #{muti_cls_forward.1} parent=11 // pred_region
        _
      $region16: #{muti_cls_forward.1} parent=11 // pred_fallthru
        _
      // Predicated region
      $region17: #{muti_cls_forward.1} parent=11 // pred_check
        %p121 = pneg %p77
      $region18: #{muti_cls_forward.1} parent=11 // pred_check_branch
        %123 = sbr.rel (%p121) target = $region20
      $region19: #{muti_cls_forward.1} parent=11 // pred_region
        _
      $region20: #{muti_cls_forward.1} parent=11 // pred_fallthru
        _
    $region12: #{muti_cls_forward.1} parent=5 // pred_fallthru
      _
    %p124 = scmp.lt.s32.totalorder %s9, 2
    // Predicated region
    $region21: #{muti_cls_forward.1} parent=5 // pred_check
      %p125 = pneg %p124
    $region22: #{muti_cls_forward.1} parent=5 // pred_check_branch
      %127 = sbr.rel (%p125) target = $region24
    $region23: #{muti_cls_forward.1} parent=5 // pred_region
      // Predicated region
      $region25: #{muti_cls_forward.1} parent=23 // pred_check
        %p128 = pneg %p29
      $region26: #{muti_cls_forward.1} parent=23 // pred_check_branch
        %130 = sbr.rel (%p128) target = $region28
      $region27: #{muti_cls_forward.1} parent=23 // pred_region
        %s131 = smul.u32 4, %s9
        %p132 = scmp.lt.s32.totalorder %s131, 7
        %s133 = scalar_select %p132, %s131, 7
        %s134 = smul.addr %s133, 8
        %s135 = scalar_lea.vmem %s0, %s134
        %s136 = smul.u32 4, %s9
      $region28: #{muti_cls_forward.1} parent=23 // pred_fallthru
        _
    $region24: #{muti_cls_forward.1} parent=5 // pred_fallthru
      _
    %p137 = scmp.le.s32.totalorder 1, %s9
    %p138 = scmp.lt.s32.totalorder %s9, 3
    %p139 = pnand %p137, %p138
    %p140 = pneg %p139
    // Predicated region
    $region29: #{muti_cls_forward.1} parent=5 // pred_check
      _
    $region30: #{muti_cls_forward.1} parent=5 // pred_check_branch
      %142 = sbr.rel (%p139) target = $region32
    $region31: #{muti_cls_forward.1} parent=5 // pred_region
      %s143 = ssub.s32 %s9, 1
      %s144 = smul.u32 4, %s14
      %p145 = scmp.lt.s32.totalorder %s144, 7
      %s146 = scalar_select %p145, %s144, 7
      %s147 = smul.addr %s146, 8
      %s148 = scalar_lea.vmem %s0, %s147
      %p149 = pneg %p35
      %p150 = pneg %p32
      %p151 = pneg %p56
      %p152 = pneg %p53
      %p153 = pneg %p77
      %p154 = pneg %p74
      %p155 = pneg %p103
      %p156 = pneg %p100
      %s157 = smul.u32 4, %s14
      %p158 = scmp.lt.s32.totalorder %s157, 7
      %s159 = scalar_select %p158, %s157, 7
      %s160 = smul.addr %s159, 8
      %s161 = scalar_lea.vmem %s3, %s160
      %s162 = smul.u32 4, %s14
      %p163 = scmp.lt.s32.totalorder %s162, 7
      %s164 = scalar_select %p163, %s162, 7
      %s165 = smul.addr %s164, 8
      %s166 = scalar_lea.vmem %s0, %s165
      %s167 = smul.u32 4, %s14
      %s168 = smul.u32 4, %s14
      %p169 = scmp.lt.s32.totalorder %s168, 7
      %s170 = scalar_select %p169, %s168, 7
      %s171 = smul.addr %s170, 8
      %s172 = scalar_lea.vmem %s3, %s171
      %s173 = smul.u32 4, %s14
      %v174 = vld [vmem:[%s166] sm:$0xff]
      %v175 = vld [vmem:[%s166 + $0x8] sm:$0xff]
      %v176 = vld [vmem:[%s166 + $0x10] sm:$0xff]
      %v177 = vld [vmem:[%s166 + $0x18] sm:$0xff]
      %v178 = vld [vmem:[%s1] sm:$0xff]
      %v179 = vld [vmem:[%s1 + $0x8] sm:$0xff]
      %v180 = vld [vmem:[%s1 + $0x10] sm:$0xff]
      %v181 = vld [vmem:[%s1 + $0x18] sm:$0xff]
      %v182 = vld [vmem:[%s2] sm:$0x1]
      %v184 = vlaneseq
      %v185 = vshrl.u32 %v184, 7
      %v186 = vsub.s32 0, %v185
      %v187 = vrot.slane %v182, %v186
      %vm189 = vcmask 261120
      %v191 = vsel %vm189, %v174, 0
      %v194 = vsel %vm189, %v175, 0
      %v197 = vsel %vm189, %v176, 0
      %v200 = vsel %vm189, %v177, 0
      %202 = vmatprep.subr.mxu0 0.0
      %203 = vmatpush1.msra.mxu0 %v178
      %204 = vmatprep.subr.mxu0 0.0
      %205 = vmatpush1.msra.mxu0 %v179
      %206 = vmatprep.subr.mxu0 0.0
      %207 = vmatpush1.msra.mxu0 %v180
      %208 = vmatprep.subr.mxu0 0.0
      %209 = vmatpush1.msra.mxu0 %v181
      %210 = vmatprep.subr.mxu0 0.0
      %211 = vmatpush1.msra.mxu0 0.0
      %212 = vmatprep.subr.mxu0 0.0
      %213 = vmatpush1.msra.mxu0 0.0
      %214 = vmatprep.subr.mxu0 0.0
      %215 = vmatpush1.msra.mxu0 0.0
      %216 = vmatprep.subr.mxu0 0.0
      %217 = vmatpush1.msra.mxu0 0.0
      %218 = vmatprep.subr.mxu0 0.0
      %219 = vmatpush1.msra.mxu0 0.0
      %220 = vmatprep.subr.mxu0 0.0
      %221 = vmatpush1.msra.mxu0 0.0
      %222 = vmatprep.subr.mxu0 0.0
      %223 = vmatpush1.msra.mxu0 0.0
      %224 = vmatprep.subr.mxu0 0.0
      %225 = vmatpush1.msra.mxu0 0.0
      %226 = vmatprep.subr.mxu0 0.0
      %227 = vmatpush1.msra.mxu0 0.0
      %228 = vmatprep.subr.mxu0 0.0
      %229 = vmatpush1.msra.mxu0 0.0
      %230 = vmatprep.subr.mxu0 0.0
      %231 = vmatpush1.msra.mxu0 0.0
      %232 = vmatprep.subr.mxu0 0.0
      %233 = vmatpush1.msra.mxu0 0.0
      %234 = vmatprep.subr.mxu0 0.0
      %235 = vmatpush1.msra.mxu0 0.0
      %236 = vmatprep.subr.mxu0 0.0
      %237 = vmatpush1.msra.mxu0 0.0
      %238 = vmatprep.subr.mxu0 0.0
      %239 = vmatpush1.msra.mxu0 0.0
      %240 = vmatprep.subr.mxu0 0.0
      %241 = vmatpush1.msra.mxu0 0.0
      %242 = vmatprep.subr.mxu0 0.0
      %243 = vmatpush1.msra.mxu0 0.0
      %244 = vmatprep.subr.mxu0 0.0
      %245 = vmatpush1.msra.mxu0 0.0
      %246 = vmatprep.subr.mxu0 0.0
      %247 = vmatpush1.msra.mxu0 0.0
      %248 = vmatprep.subr.mxu0 0.0
      %249 = vmatpush1.msra.mxu0 0.0
      %250 = vmatprep.subr.mxu0 0.0
      %251 = vmatpush1.msra.mxu0 0.0
      %252 = vmatprep.subr.mxu0 0.0
      %253 = vmatpush1.msra.mxu0 0.0
      %254 = vmatprep.subr.mxu0 0.0
      %255 = vmatpush1.msra.mxu0 0.0
      %256 = vmatprep.subr.mxu0 0.0
      %257 = vmatpush1.msra.mxu0 0.0
      %258 = vmatprep.subr.mxu0 0.0
      %259 = vmatpush1.msra.mxu0 0.0
      %260 = vmatprep.subr.mxu0 0.0
      %261 = vmatpush1.msra.mxu0 0.0
      %262 = vmatprep.subr.mxu0 0.0
      %263 = vmatpush1.msra.mxu0 0.0
      %264 = vmatprep.subr.mxu0 0.0
      %265 = vmatpush1.msra.mxu0 0.0
      %266 = vmatprep.mubr.f32.mxu0 0.0
      %267 = vmatmul.mubr.f32.gmra.mrb[0].mxu0 %v191
      %v268 = vpop.f32.mrb[0].mxu0
      %v269 = vadd.f32 %v187, %v268
      %v270 = vpop.f32.mrb[0].mxu0
      %271 = vmatprep.mubr.f32.mxu0 0.0
      %272 = vmatmul.mubr.f32.gmra.mrb[0].mxu0 %v194
      %v273 = vpop.f32.mrb[0].mxu0
      %v274 = vadd.f32 %v187, %v273
      %v275 = vpop.f32.mrb[0].mxu0
      %276 = vmatprep.mubr.f32.mxu0 0.0
      %277 = vmatmul.mubr.f32.gmra.mrb[0].mxu0 %v197
      %v278 = vpop.f32.mrb[0].mxu0
      %v279 = vadd.f32 %v187, %v278
      %v280 = vpop.f32.mrb[0].mxu0
      %281 = vmatprep.mubr.f32.mxu0 0.0
      %282 = vmatmul.mubr.f32.gmra.mrb[0].mxu0 %v200
      %v283 = vpop.f32.mrb[0].mxu0
      %v284 = vadd.f32 %v187, %v283
      %v285 = vpop.f32.mrb[0].mxu0
      %286 = vdwg.mxu0
      %287 = vmax.xlane.f32.xlu0 %v269
      %v288 = vpop.xlane.xlu0 %287
      %289 = vmax.xlane.f32.xlu0 %v274
      %v290 = vpop.xlane.xlu0 %289
      %291 = vmax.xlane.f32.xlu0 %v279
      %v292 = vpop.xlane.xlu0 %291
      %293 = vmax.xlane.f32.xlu0 %v284
      %v294 = vpop.xlane.xlu0 %293
      %v295 = vsub.f32 %v269, %v288
      %v296 = vsub.f32 %v274, %v290
      %v297 = vsub.f32 %v279, %v292
      %v298 = vsub.f32 %v284, %v294
      %v299 = vmul.f32 %v295, 1.442695
      %v300 = vpow.pop %v299
      %v301 = vmul.f32 %v296, 1.442695
      %v302 = vpow.pop %v301
      %v303 = vmul.f32 %v297, 1.442695
      %v304 = vpow.pop %v303
      %v305 = vmul.f32 %v298, 1.442695
      %v306 = vpow.pop %v305
      %307 = vadd.xlane.f32.xlu0 %v300
      %v308 = vpop.xlane.xlu0 %307
      %309 = vadd.xlane.f32.xlu0 %v302
      %v310 = vpop.xlane.xlu0 %309
      %311 = vadd.xlane.f32.xlu0 %v304
      %v312 = vpop.xlane.xlu0 %311
      %313 = vadd.xlane.f32.xlu0 %v306
      %v314 = vpop.xlane.xlu0 %313
      %v315 = vrcp.pop %v308
      %v316 = vmul.f32 %v300, %v315
      %v317 = vrcp.pop %v310
      %v318 = vmul.f32 %v302, %v317
      %v319 = vrcp.pop %v312
      %v320 = vmul.f32 %v304, %v319
      %v321 = vrcp.pop %v314
      %v322 = vmul.f32 %v306, %v321
      %vm323 = vcmask 80896
      %324 = vst.msk [vmem:[%s172] sm:$0xff] %vm323, %v316
      %325 = vst.msk [vmem:[%s172 + $0x8] sm:$0xff] %vm323, %v318
      %326 = vst.msk [vmem:[%s172 + $0x10] sm:$0xff] %vm323, %v320
      %327 = vst.msk [vmem:[%s172 + $0x18] sm:$0xff] %vm323, %v322
      %s328 = smul.u32 4, %s14
      %p329 = scmp.lt.s32.totalorder %s328, 7
      %s330 = scalar_select %p329, %s328, 7
      %s331 = smul.addr %s330, 8
      %s332 = scalar_lea.vmem %s3, %s331
      // Predicated region
      $region33: #{muti_cls_forward.1} parent=31 // pred_check
        %p333 = pneg %p100
      $region34: #{muti_cls_forward.1} parent=31 // pred_check_branch
        %335 = sbr.rel (%p333) target = $region36
      $region35: #{muti_cls_forward.1} parent=31 // pred_region
        %s336 = smul.u32 4, %s14
      $region36: #{muti_cls_forward.1} parent=31 // pred_fallthru
        _
    $region32: #{muti_cls_forward.1} parent=5 // pred_fallthru
      _
    %p337 = scmp.le.s32.totalorder 2, %s9
    // Predicated region
    $region37: #{muti_cls_forward.1} parent=5 // pred_check
      %p338 = pneg %p337
    $region38: #{muti_cls_forward.1} parent=5 // pred_check_branch
      %340 = sbr.rel (%p338) target = $region40
    $region39: #{muti_cls_forward.1} parent=5 // pred_region
      %s341 = ssub.s32 %s9, 2
      // Predicated region
      $region41: #{muti_cls_forward.1} parent=39 // pred_check
        %p342 = pneg %p106
      $region42: #{muti_cls_forward.1} parent=39 // pred_check_branch
        %344 = sbr.rel (%p342) target = $region44
      $region43: #{muti_cls_forward.1} parent=39 // pred_region
        %s345 = smul.u32 4, %s15
        %p346 = scmp.lt.s32.totalorder %s345, 7
        %s347 = scalar_select %p346, %s345, 7
        %s348 = smul.addr %s347, 8
        %s349 = scalar_lea.vmem %s3, %s348
      $region44: #{muti_cls_forward.1} parent=39 // pred_fallthru
        _
    $region40: #{muti_cls_forward.1} parent=5 // pred_fallthru
      _
  $region6: #{muti_cls_forward.1} parent=0 // loop_footer
    %s13 = sadd.s32 1, %s9
  $region7: #{muti_cls_forward.1} parent=0 // loop_footer_branch
    %8 = sbr.rel target = $region3
  $region8: #{muti_cls_forward.1} parent=0 // loop_exit
    _

</llo_original>
